<compile_context>
chip_gen: v5e
topology: v5e:2x2
jax: 0.10.0
libtpu: 0.0.40
codegen_flags: <defaults>
</compile_context>

<pallas_src>
import jax
import jax.numpy as jnp
from jax.experimental import pallas as pl
from jax.experimental.pallas import tpu as pltpu


_LANES = 512              # lane-dense last dim: large multiple of 128 -> unmasked stores
_MAX_TILE_ROWS = 2048     # 2048 x 512 f32 = 4 MiB block; 16 MiB live double-buffered


def _pcsample_kernel(x_ref, o_ref):
    # Elementwise hot path: out = x + 1 (in the input dtype).
    o_ref[...] = x_ref[...] + jnp.asarray(1, dtype=o_ref.dtype)


def _choose_tile_rows(rows):
    """Pick a sublane-aligned tile height that (a) caps the block at ~4 MiB and
    (b) yields an even number of near-equal blocks so v7x's two TensorCores
    split the 'parallel' grid axis evenly."""
    if rows <= 8:
        # Single block equal to the full extent (allowed even if rows % 8 != 0).
        return rows
    num_blocks = max(2, pl.cdiv(rows, _MAX_TILE_ROWS))
    if num_blocks % 2:
        num_blocks += 1
    tile = pl.cdiv(rows, num_blocks)
    tile = ((tile + 7) // 8) * 8          # sublane-align the block height
    return min(tile, _MAX_TILE_ROWS)


def _add_one_pallas(x):
    """x + 1 via a tiled, pipelined Pallas TPU kernel.

    Precondition: x.size > 0 and x.size % _LANES == 0 (checked by the caller),
    so the (rows, 512) relayout is a free row-major reshape — no HBM copy in
    or out of the kernel.
    """
    orig_shape = x.shape
    n = x.size
    rows = n // _LANES
    slab = x.reshape(rows, _LANES)        # free relayout, no copy

    tile_rows = _choose_tile_rows(rows)
    grid = (pl.cdiv(rows, tile_rows),)    # ragged last block handled by Pallas

    out = pl.pallas_call(
        _pcsample_kernel,
        out_shape=jax.ShapeDtypeStruct((rows, _LANES), x.dtype),
        grid=grid,
        in_specs=[pl.BlockSpec((tile_rows, _LANES), lambda i: (i, 0))],
        out_specs=pl.BlockSpec((tile_rows, _LANES), lambda i: (i, 0)),
        compiler_params=pltpu.CompilerParams(
            dimension_semantics=("parallel",),
            # 32 MiB scoped VMEM: clears v5e's 16 MiB default for the 16 MiB
            # live footprint, and stays within v7x's 64 MiB physical VMEM.
            vmem_limit_bytes=32 * 1024 * 1024,
        ),
        cost_estimate=pl.CostEstimate(
            flops=n,
            transcendentals=0,
            bytes_accessed=2 * n * x.dtype.itemsize,
        ),
    )(slab)

    return out.reshape(orig_shape)


class PCSampleLayer:
    """JAX/Pallas equivalent of the PyTorch PCSampleLayer.

    The sampling hyperparameters are stored (as in the PyTorch __init__) but —
    matching the reference forward — do not affect the computation.
    """

    # Pallas path only pays off (launch overhead) above this size; below it,
    # or when the size is not a multiple of 512, the fused XLA add is already
    # at the HBM roofline with zero extra copies.
    _PALLAS_MIN_ELEMENTS = 256 * 1024

    def __init__(self, input_xyz_num, sample_xyz_num, sample_method):
        self.input_xyz_num = (input_xyz_num,)
        self.sample_xyz_num = (sample_xyz_num,)
        self.sample_method = (sample_method,)
        # TODO(synk): the real `pc_sample` (e.g. farthest-point sampling) only
        # exists as an ONNX symbolic op with no runtime semantics to translate.

    def __call__(self, input_xyzs, force_pallas=False):
        n = input_xyzs.size
        aligned = (n > 0) and (n % _LANES == 0)
        if aligned and (force_pallas or n >= self._PALLAS_MIN_ELEMENTS):
            return _add_one_pallas(input_xyzs)
        # Unaligned or tiny: fused XLA elementwise add (already roofline-bound).
        return input_xyzs + jnp.asarray(1, dtype=input_xyzs.dtype)


if __name__ == "__main__":
    key = jax.random.PRNGKey(0)
    k1, k2, k3 = jax.random.split(key, 3)

    layer = PCSampleLayer(input_xyz_num=16, sample_xyz_num=8,
                          sample_method="fps")

    # 1) Tiny, lane-unaligned point cloud (batch=2, 16 points, xyz):
    #    plain-JAX fast path (96 elements, not a multiple of 512).
    x_small = jax.random.normal(k1, (2, 16, 3), dtype=jnp.float32)
    out_small = jax.block_until_ready(layer(x_small))
    assert out_small.shape == x_small.shape and out_small.dtype == x_small.dtype
    assert jnp.allclose(out_small, x_small + 1.0, atol=1e-6), "small mismatch"

    # 2) Small lane-aligned point cloud (2, 512, 3) -> 3072 elems = 6 rows of
    #    512 lanes: forced Pallas path, single full-extent block, no copies.
    x_aligned = jax.random.normal(k2, (2, 512, 3), dtype=jnp.float32)
    out_aligned = jax.block_until_ready(layer(x_aligned, force_pallas=True))
    assert out_aligned.shape == x_aligned.shape
    assert jnp.allclose(out_aligned, x_aligned + 1.0, atol=1e-6), "pallas mismatch"

    # 3) Larger aligned point cloud (2, 8192, 3) -> 96 rows: Pallas path with a
    #    balanced 2-block grid (2 x 48 rows) exercising pipelining / megacore.
    x_med = jax.random.normal(k3, (2, 8192, 3), dtype=jnp.float32)
    out_med = jax.block_until_ready(layer(x_med, force_pallas=True))
    assert out_med.shape == x_med.shape and out_med.dtype == x_med.dtype
    assert jnp.allclose(out_med, x_med + 1.0, atol=1e-6), "tiled mismatch"

    print("KERNEL_OK")
</pallas_src>

<mosaic_0001>
module attributes {stable_mosaic.version = 11 : i64} {
  func.func @_pcsample_kernel(%arg0: i32, %arg1: memref<6x512xf32, #tpu.memory_space<vmem>>, %arg2: memref<6x512xf32, #tpu.memory_space<vmem>>) attributes {dimension_semantics = [#tpu.dimension_semantics<parallel>], iteration_bounds = array<i64: 1>, scalar_prefetch = 0 : i64, scratch_operands = 0 : i64, tpu.core_type = #tpu.core_type<tc>, window_params = [{transform_indices = @transform_0, window_bounds = array<i64: 6, 512>}, {transform_indices = @transform_1, window_bounds = array<i64: 6, 512>}]} {
    %c0 = arith.constant 0 : index
    %c0_0 = arith.constant 0 : index
    %0 = vector.load %arg1[%c0, %c0_0] : memref<6x512xf32, #tpu.memory_space<vmem>>, vector<6x512xf32>
    %cst = arith.constant 1.000000e+00 : f32
    %1 = vector.broadcast %cst : f32 to vector<6x512xf32>
    %2 = arith.addf %0, %1 : vector<6x512xf32>
    %c0_1 = arith.constant 0 : index
    %c0_2 = arith.constant 0 : index
    %3 = vector.load %arg2[%c0_1, %c0_2] : memref<6x512xf32, #tpu.memory_space<vmem>>, vector<6x512xf32>
    tpu.vector_store %arg2[%c0_1, %c0_2], %2 {strides = array<i32>} : memref<6x512xf32, #tpu.memory_space<vmem>>, vector<6x512xf32>,
    return
  }
  func.func @transform_0(%arg0: i32) -> (i32, i32) {
    %c0_i32 = arith.constant 0 : i32
    %c0_i32_0 = arith.constant 0 : i32
    return %arg0, %c0_i32 : i32, i32
  }
  func.func @transform_1(%arg0: i32) -> (i32, i32) {
    %c0_i32 = arith.constant 0 : i32
    %c0_i32_0 = arith.constant 0 : i32
    return %arg0, %c0_i32 : i32, i32
  }
}

</mosaic_0001>

<llo_original>
// kernel: tpu_custom_call.1
$region0: #{tpu_custom_call.1}
  #allocation0 [shape = 'u32[]', space=smem, size = 0x4, offset = 0x4, fixed_abs, tag = 'smem constant byte address 0x4 - core index']
  #allocation1 [shape = 'u32[72,128]{1,0:T(1,128)}', space=vmem, size = 0x9000, scoped, tag = 'internal scratch']
  %s0 = inlined_call_operand.hbm [shape: f32[6,512], index: 0, kind: input, shape index: {}]
  %s1 = inlined_call_operand.hbm [shape: f32[6,512], index: 1, kind: output, shape index: {}]
  %s2 = sld [smem:[#allocation0]]
  $region18: #{tpu_custom_call.1} parent=0
    _
  %s4 = ssub.s32 1, %s2
  %s5 = scalar_select 0, %s4, %s2
  $region1: #{tpu_custom_call.1} parent=0
    #allocation2 [shape = 'u8[16384]{0}', space=vmem, size = 0x4000, scoped, tag = 'input window, operand 0, single buffered']
    #allocation3 [shape = 's32[1]{0}', space=sflag, size = 0x4, scoped, tag = 'scoped memory for tpu_custom_call.1']
    #allocation4 [shape = 's32[1]{0}', space=sflag, size = 0x4, scoped, tag = 'scoped memory for tpu_custom_call.1']
    #allocation5 [shape = 'u8[16384]{0}', space=vmem, size = 0x4000, scoped, tag = 'output window, operand 0, single buffered']
    %6 = vsyncpa [#allocation3], 0
    %7 = vsyncpa [#allocation4], 0
    // Predicated region
    $region2: #{tpu_custom_call.1} parent=1 // pred_check
      _
    $region3: #{tpu_custom_call.1} parent=1 // pred_check_branch
      %9 = sbr.rel (0) target = $region5
    $region4: #{tpu_custom_call.1} parent=1 // pred_region
      %11 = vsyncadd [#allocation3], 0
      %s13 = sshll.u32 %s0, 4
      %s14 = int_to_ptr.hbm [resolvable:$true] %s13
      %s15 = sshll.u32 [#allocation2], 4
      %s16 = int_to_ptr.vmem [resolvable:$true] %s15
      %18 = dma.hbm_to_vmem [thread:$0]  %s14, 512, %s16, [#allocation3]
    $region5: #{tpu_custom_call.1} parent=1 // pred_fallthru
      _
    // Predicated region
    $region6: #{tpu_custom_call.1} parent=1 // pred_check
      _
    $region7: #{tpu_custom_call.1} parent=1 // pred_check_branch
      %20 = sbr.rel (0) target = $region9
    $region8: #{tpu_custom_call.1} parent=1 // pred_region
      %22 = dma.done [#allocation3], 512
    $region9: #{tpu_custom_call.1} parent=1 // pred_fallthru
      _
    %v23 = vld [vmem:[#allocation2] sm:$0x3f]
    %v24 = vld [vmem:[#allocation2 + $0x8] sm:$0x3f]
    %v25 = vld [vmem:[#allocation2 + $0x10] sm:$0x3f]
    %v26 = vld [vmem:[#allocation2 + $0x18] sm:$0x3f]
    %v27 = vadd.f32 %v23, 1.0
    %v28 = vadd.f32 %v24, 1.0
    %v29 = vadd.f32 %v25, 1.0
    %v30 = vadd.f32 %v26, 1.0
    %31 = vst [vmem:[#allocation5] sm:$0x3f] %v27
    %32 = vst [vmem:[#allocation5 + $0x8] sm:$0x3f] %v28
    %33 = vst [vmem:[#allocation5 + $0x10] sm:$0x3f] %v29
    %34 = vst [vmem:[#allocation5 + $0x18] sm:$0x3f] %v30
    // Predicated region
    $region10: #{tpu_custom_call.1} parent=1 // pred_check
      _
    $region11: #{tpu_custom_call.1} parent=1 // pred_check_branch
      %36 = sbr.rel (0) target = $region13
    $region12: #{tpu_custom_call.1} parent=1 // pred_region
      %38 = vsyncadd [#allocation4], 0
      %s40 = sshll.u32 [#allocation5], 4
      %s41 = int_to_ptr.vmem [resolvable:$true] %s40
      %s42 = sshll.u32 %s1, 4
      %s43 = int_to_ptr.hbm [resolvable:$true] %s42
      %45 = dma.vmem_to_hbm [thread:$0]  %s41, 512, %s43, [#allocation4]
    $region13: #{tpu_custom_call.1} parent=1 // pred_fallthru
      _
    // Predicated region
    $region14: #{tpu_custom_call.1} parent=1 // pred_check
      _
    $region15: #{tpu_custom_call.1} parent=1 // pred_check_branch
      %47 = sbr.rel (0) target = $region17
    $region16: #{tpu_custom_call.1} parent=1 // pred_region
      %49 = dma.done [#allocation4], 512
    $region17: #{tpu_custom_call.1} parent=1 // pred_fallthru
      _
    %50 = vsyncpa [#allocation3], 1
    %51 = vsyncpa [#allocation4], 1

</llo_original>
